<compile_context>
chip_gen: v5e
topology: v5e:2x2
jax: 0.10.0
libtpu: 0.0.40
codegen_flags: <defaults>
</compile_context>

<pallas_src>
import functools

import jax
import jax.numpy as jnp
from jax import lax
from jax.experimental import pallas as pl
from jax.experimental.pallas import tpu as pltpu

_LANE = 128


def _round_up(n, m):
    return (n + m - 1) // m * m


def _pad2d(a, rows, cols):
    r, c = a.shape
    if r == rows and c == cols:
        return a
    return jnp.zeros((rows, cols), a.dtype).at[:r, :c].set(a)


# --------------------------------------------------------------------------
# Kernel
# --------------------------------------------------------------------------
def adaptive_decoding_kernel(x_ref, w1_ref, b1_ref, w2_ref, b2_ref, o_ref, *,
                             approx_gelu):
    """Processes one (tm, Din) tile of x against VMEM-resident weights."""
    x = x_ref[...]
    if x.dtype != w1_ref.dtype:
        x = x.astype(w1_ref.dtype)          # in-kernel bf16 cast (no HBM copy)
    # fc1 on the MXU, f32 accumulation, bias in f32.
    h = jnp.dot(x, w1_ref[...], preferred_element_type=jnp.float32)
    h = h + b1_ref[...]
    if approx_gelu:
        # tanh-approx GELU: transcendental goes to the EUP slot (free-ish)
        # instead of an erf polynomial on the VALU.  ~1e-3 delta vs exact erf.
        c = jnp.float32(0.7978845608028654)   # sqrt(2/pi)
        h = 0.5 * h * (1.0 + jnp.tanh(c * (h + jnp.float32(0.044715) * h * h * h)))
    else:
        # Exact erf GELU (matches torch.nn.GELU(approximate='none')).
        h = 0.5 * h * (1.0 + lax.erf(h * jnp.float32(0.7071067811865476)))
    # dropout -> identity (eval mode).
    # fc2; correction_scale/bias were folded into W2/b2 at prepare time.
    y = jnp.dot(h.astype(w2_ref.dtype), w2_ref[...],
                preferred_element_type=jnp.float32)
    o_ref[...] = (y + b2_ref[...]).astype(o_ref.dtype)


# --------------------------------------------------------------------------
# One-time parameter preparation (hoisted out of the per-call path)
# --------------------------------------------------------------------------
def prepare_params(w1, b1, w2, b2, correction_scale, correction_bias, *,
                   use_bf16_mxu=False):
    """w1:[Din,H] b1:[1,H] w2:[H,Dout] b2/scale/cbias:[1,Dout].

    Folds the correction epilogue into fc2:
      (h @ W2 + b2) * scale + cbias == h @ (W2*scale) + (b2*scale + cbias)
    and pads only the hidden dim H to the 128-lane width (pad columns/rows are
    exact zeros, GELU(0)=0, so the math is unchanged).  Din / Dout stay
    unpadded so x and the output never need padded HBM copies.
    """
    Din, H = w1.shape
    Dout = w2.shape[1]
    h_p = _round_up(H, _LANE)

    w2_fused = w2.astype(jnp.float32) * correction_scale.astype(jnp.float32)
    b2_fused = (b2.astype(jnp.float32) * correction_scale.astype(jnp.float32)
                + correction_bias.astype(jnp.float32))

    w1_p = _pad2d(w1.astype(jnp.float32), Din, h_p)
    b1_p = _pad2d(b1.astype(jnp.float32), 1, h_p)
    w2_p = _pad2d(w2_fused, h_p, Dout)
    b2_p = b2_fused.reshape(1, Dout)

    if use_bf16_mxu:
        # bf16 MXU weights: halves weight HBM/VMEM traffic and lifts MXU
        # throughput on every generation (v5e's MXU is bf16-native as well).
        # Note: scale is folded *before* quantization, so W2*scale is rounded
        # in bf16; accumulation/GELU/bias stay in f32 inside the kernel.
        w1_p = w1_p.astype(jnp.bfloat16)
        w2_p = w2_p.astype(jnp.bfloat16)

    return w1_p, b1_p, w2_p, b2_p


def _choose_tm(B, block_m, use_bf16):
    """Batch tile: aim for >= ~4 grid steps per TensorCore (2-core megacore
    assumed) so x/out DMA overlaps compute; bf16 prefers 256-row granule."""
    if B <= 256:
        return B                                  # single full-extent tile
    granule = 256 if use_bf16 else 128
    target_steps = 8                              # ~4 per core on 2 cores
    tm = _round_up(pl.cdiv(B, target_steps), granule)
    tm = max(granule, min(tm, _round_up(block_m, granule)))
    return tm


# --------------------------------------------------------------------------
# Forward wrapper
# --------------------------------------------------------------------------
def adaptive_decoding_layer(x, prepared_params, *, block_m=512,
                            approx_gelu=True, out_dtype=None):
    """x: [B, Din]; prepared_params from prepare_params().  Returns [B, Dout]."""
    w1_p, b1_p, w2_p, b2_p = prepared_params
    B, Din = x.shape
    assert w1_p.shape[0] == Din, "x feature dim must match prepared W1"
    h_p = w1_p.shape[1]
    Dout = w2_p.shape[1]
    out_dtype = x.dtype if out_dtype is None else out_dtype
    use_bf16 = w1_p.dtype == jnp.bfloat16

    tm = _choose_tm(B, block_m, use_bf16)
    grid = (pl.cdiv(B, tm),)

    def nbytes(a):
        return a.size * a.dtype.itemsize

    out_itemsize = jnp.dtype(out_dtype).itemsize
    resident = nbytes(w1_p) + nbytes(b1_p) + nbytes(w2_p) + nbytes(b2_p)
    streamed = 2 * (tm * Din * x.dtype.itemsize + tm * Dout * out_itemsize)
    try:
        vmem_cap = int(pltpu.get_tpu_info().vmem_capacity_bytes)
    except Exception:
        vmem_cap = 64 * 2 ** 20                   # conservative (v7x per-TC)
    # Resident weights are double-buffered by default; leave ~20% headroom of
    # physical VMEM for Mosaic internal scratch.
    vmem_limit = int(min(int(0.8 * vmem_cap),
                         max(32 * 2 ** 20, 2 * resident + streamed + (4 << 20))))

    kernel = functools.partial(adaptive_decoding_kernel, approx_gelu=approx_gelu)

    return pl.pallas_call(
        kernel,
        out_shape=jax.ShapeDtypeStruct((B, Dout), out_dtype),
        grid_spec=pltpu.PrefetchScalarGridSpec(
            num_scalar_prefetch=0,
            grid=grid,
            in_specs=[
                # x: streamed batch tile; Din is full-extent (no pad copy).
                pl.BlockSpec((tm, Din), lambda i: (i, 0)),
                # Weights/biases: constant index_map -> VMEM-resident.
                pl.BlockSpec((Din, h_p), lambda i: (0, 0)),    # W1
                pl.BlockSpec((1, h_p), lambda i: (0, 0)),      # b1
                pl.BlockSpec((h_p, Dout), lambda i: (0, 0)),   # W2 * scale
                pl.BlockSpec((1, Dout), lambda i: (0, 0)),     # b2*scale + cbias
            ],
            out_specs=pl.BlockSpec((tm, Dout), lambda i: (i, 0)),
        ),
        compiler_params=pltpu.CompilerParams(
            dimension_semantics=("parallel",),     # megacore-shard batch tiles
            vmem_limit_bytes=vmem_limit,
        ),
        cost_estimate=pl.CostEstimate(
            flops=2 * B * (Din * h_p + h_p * Dout),
            transcendentals=B * h_p,
            bytes_accessed=nbytes(x) + resident + B * Dout * out_itemsize,
        ),
    )(x, w1_p, b1_p, w2_p, b2_p)


# --------------------------------------------------------------------------
# Init + reference (mirrors the PyTorch module)
# --------------------------------------------------------------------------
def init_params(key, input_dim, hidden_dim, output_dim):
    """Deterministic parameter init mirroring the PyTorch module's __init__."""
    k1, k2, k3, k4 = jax.random.split(key, 4)

    # fc1: xavier_uniform weight, default-Linear uniform bias.
    limit1 = (6.0 / (input_dim + hidden_dim)) ** 0.5
    w1 = jax.random.uniform(k1, (input_dim, hidden_dim), jnp.float32,
                            minval=-limit1, maxval=limit1)
    bound1 = 1.0 / (input_dim ** 0.5)
    b1 = jax.random.uniform(k2, (1, hidden_dim), jnp.float32,
                            minval=-bound1, maxval=bound1)

    if input_dim == output_dim:
        # torch.nn.init.eye_ on fc2.weight ([Dout, H] torch layout), zero bias.
        w2 = jnp.eye(output_dim, hidden_dim, dtype=jnp.float32).T   # [H, Dout]
        b2 = jnp.zeros((1, output_dim), jnp.float32)
    else:
        limit2 = (6.0 / (hidden_dim + output_dim)) ** 0.5
        w2 = jax.random.uniform(k3, (hidden_dim, output_dim), jnp.float32,
                                minval=-limit2, maxval=limit2)
        bound2 = 1.0 / (hidden_dim ** 0.5)
        b2 = jax.random.uniform(k4, (1, output_dim), jnp.float32,
                                minval=-bound2, maxval=bound2)

    correction_bias = jnp.zeros((1, output_dim), jnp.float32)
    correction_scale = jnp.ones((1, output_dim), jnp.float32)
    return w1, b1, w2, b2, correction_scale, correction_bias


def reference_forward(x, w1, b1, w2, b2, scale, cbias):
    h = x @ w1 + b1
    h = jax.nn.gelu(h, approximate=False)
    y = h @ w2 + b2
    return y * scale + cbias


if __name__ == "__main__":
    # --- small test: module-consistent small shapes, single grid step ------
    batch, input_dim, hidden_dim, output_dim = 8, 32, 64, 32
    kx, kp = jax.random.split(jax.random.PRNGKey(0))
    x = jax.random.normal(kx, (batch, input_dim), jnp.float32)
    raw = init_params(kp, input_dim, hidden_dim, output_dim)
    ref = reference_forward(x, *raw)

    prep = prepare_params(*raw)                       # hoisted, done once
    # Exact-erf GELU path: matches torch.nn.GELU() numerics tightly.
    out_exact = jax.block_until_ready(
        adaptive_decoding_layer(x, prep, approx_gelu=False))
    assert out_exact.shape == (batch, output_dim)
    assert jnp.allclose(out_exact, ref, atol=1e-5, rtol=1e-5)
    # Default tanh-approx GELU (EUP-routed): ~1e-3 numerics delta vs erf.
    out_tanh = jax.block_until_ready(adaptive_decoding_layer(x, prep))
    assert jnp.allclose(out_tanh, ref, atol=5e-3, rtol=5e-3)

    # --- larger test: default module dims, multi-step grid + partial tile --
    batch2, in2, hid2, out2 = 600, 300, 512, 300
    kx2, kp2 = jax.random.split(jax.random.PRNGKey(1))
    x2 = jax.random.normal(kx2, (batch2, in2), jnp.float32)
    raw2 = init_params(kp2, in2, hid2, out2)
    ref2 = reference_forward(x2, *raw2)

    prep2 = prepare_params(*raw2)
    y_f32 = jax.block_until_ready(
        adaptive_decoding_layer(x2, prep2, approx_gelu=False, block_m=256))
    assert y_f32.shape == (batch2, out2)
    assert jnp.allclose(y_f32, ref2, atol=1e-2, rtol=1e-2)

    # bf16-MXU fast path (all generations): bf16 weights + in-kernel bf16 x
    # cast on the MXU, f32 accumulation/GELU/bias; looser tolerance because
    # the MXU inputs are quantized to bf16.
    prep_bf16 = prepare_params(*raw2, use_bf16_mxu=True)
    y_bf16 = jax.block_until_ready(adaptive_decoding_layer(x2, prep_bf16))
    assert jnp.allclose(y_bf16, ref2, atol=5e-2, rtol=5e-2)

    print("KERNEL_OK")
</pallas_src>

<mosaic_0001>
module attributes {stable_mosaic.version = 11 : i64} {
  func.func @adaptive_decoding_kernel(%arg0: i32, %arg1: memref<8x32xf32, #tpu.memory_space<vmem>>, %arg2: memref<32x128xf32, #tpu.memory_space<vmem>>, %arg3: memref<1x128xf32, #tpu.memory_space<vmem>>, %arg4: memref<128x32xf32, #tpu.memory_space<vmem>>, %arg5: memref<1x32xf32, #tpu.memory_space<vmem>>, %arg6: memref<8x32xf32, #tpu.memory_space<vmem>>) attributes {dimension_semantics = [#tpu.dimension_semantics<parallel>], iteration_bounds = array<i64: 1>, scalar_prefetch = 0 : i64, scratch_operands = 0 : i64, tpu.core_type = #tpu.core_type<tc>, window_params = [{transform_indices = @transform_0, window_bounds = array<i64: 8, 32>}, {pipeline_mode = #tpu.pipeline_mode<synchronous>, transform_indices = @transform_1, window_bounds = array<i64: 32, 128>}, {pipeline_mode = #tpu.pipeline_mode<synchronous>, transform_indices = @transform_2, window_bounds = array<i64: 1, 128>}, {pipeline_mode = #tpu.pipeline_mode<synchronous>, transform_indices = @transform_3, window_bounds = array<i64: 128, 32>}, {pipeline_mode = #tpu.pipeline_mode<synchronous>, transform_indices = @transform_4, window_bounds = array<i64: 1, 32>}, {transform_indices = @transform_5, window_bounds = array<i64: 8, 32>}]} {
    %c0 = arith.constant 0 : index
    %c0_0 = arith.constant 0 : index
    %0 = vector.load %arg1[%c0, %c0_0] : memref<8x32xf32, #tpu.memory_space<vmem>>, vector<8x32xf32>
    %c0_1 = arith.constant 0 : index
    %c0_2 = arith.constant 0 : index
    %1 = vector.load %arg2[%c0_1, %c0_2] : memref<32x128xf32, #tpu.memory_space<vmem>>, vector<32x128xf32>
    %cst = arith.constant dense<0.000000e+00> : vector<8x128xf32>
    %2 = tpu.matmul %0, %1, %cst {dimension_numbers = #tpu.dot_dimension_numbers<[1], [0], [0], [1], [0, 0, 1, 1], [], []>} : vector<8x32xf32>, vector<32x128xf32>, vector<8x128xf32> -> vector<8x128xf32>
    %c0_3 = arith.constant 0 : index
    %c0_4 = arith.constant 0 : index
    %3 = vector.load %arg3[%c0_3, %c0_4] : memref<1x128xf32, #tpu.memory_space<vmem>>, vector<1x128xf32>
    %4 = vector.broadcast %3 : vector<1x128xf32> to vector<8x128xf32>
    %5 = arith.addf %2, %4 : vector<8x128xf32>
    %cst_5 = arith.constant 5.000000e-01 : f32
    %6 = vector.broadcast %cst_5 : f32 to vector<8x128xf32>
    %7 = arith.mulf %6, %5 : vector<8x128xf32>
    %cst_6 = arith.constant 0.707106769 : f32
    %8 = vector.broadcast %cst_6 : f32 to vector<8x128xf32>
    %9 = arith.mulf %5, %8 : vector<8x128xf32>
    %10 = math.erf %9 : vector<8x128xf32>
    %cst_7 = arith.constant 1.000000e+00 : f32
    %11 = vector.broadcast %cst_7 : f32 to vector<8x128xf32>
    %12 = arith.addf %11, %10 : vector<8x128xf32>
    %13 = arith.mulf %7, %12 : vector<8x128xf32>
    %c0_8 = arith.constant 0 : index
    %c0_9 = arith.constant 0 : index
    %14 = vector.load %arg4[%c0_8, %c0_9] : memref<128x32xf32, #tpu.memory_space<vmem>>, vector<128x32xf32>
    %cst_10 = arith.constant dense<0.000000e+00> : vector<8x32xf32>
    %15 = tpu.matmul %13, %14, %cst_10 {dimension_numbers = #tpu.dot_dimension_numbers<[1], [0], [0], [1], [0, 0, 1, 1], [], []>} : vector<8x128xf32>, vector<128x32xf32>, vector<8x32xf32> -> vector<8x32xf32>
    %c0_11 = arith.constant 0 : index
    %c0_12 = arith.constant 0 : index
    %16 = vector.load %arg5[%c0_11, %c0_12] : memref<1x32xf32, #tpu.memory_space<vmem>>, vector<1x32xf32>
    %17 = vector.broadcast %16 : vector<1x32xf32> to vector<8x32xf32>
    %18 = arith.addf %15, %17 : vector<8x32xf32>
    %c0_13 = arith.constant 0 : index
    %c0_14 = arith.constant 0 : index
    %19 = vector.load %arg6[%c0_13, %c0_14] : memref<8x32xf32, #tpu.memory_space<vmem>>, vector<8x32xf32>
    tpu.vector_store %arg6[%c0_13, %c0_14], %18 {strides = array<i32>} : memref<8x32xf32, #tpu.memory_space<vmem>>, vector<8x32xf32>,
    return
  }
  func.func @transform_0(%arg0: i32) -> (i32, i32) {
    %c0_i32 = arith.constant 0 : i32
    %c0_i32_0 = arith.constant 0 : i32
    return %arg0, %c0_i32 : i32, i32
  }
  func.func @transform_1(%arg0: i32) -> (i32, i32) {
    %c0_i32 = arith.constant 0 : i32
    %c0_i32_0 = arith.constant 0 : i32
    %c0_i32_1 = arith.constant 0 : i32
    return %c0_i32, %c0_i32_0 : i32, i32
  }
  func.func @transform_2(%arg0: i32) -> (i32, i32) {
    %c0_i32 = arith.constant 0 : i32
    %c0_i32_0 = arith.constant 0 : i32
    %c0_i32_1 = arith.constant 0 : i32
    return %c0_i32, %c0_i32_0 : i32, i32
  }
  func.func @transform_3(%arg0: i32) -> (i32, i32) {
    %c0_i32 = arith.constant 0 : i32
    %c0_i32_0 = arith.constant 0 : i32
    %c0_i32_1 = arith.constant 0 : i32
    return %c0_i32, %c0_i32_0 : i32, i32
  }
  func.func @transform_4(%arg0: i32) -> (i32, i32) {
    %c0_i32 = arith.constant 0 : i32
    %c0_i32_0 = arith.constant 0 : i32
    %c0_i32_1 = arith.constant 0 : i32
    return %c0_i32, %c0_i32_0 : i32, i32
  }
  func.func @transform_5(%arg0: i32) -> (i32, i32) {
    %c0_i32 = arith.constant 0 : i32
    %c0_i32_0 = arith.constant 0 : i32
    return %arg0, %c0_i32 : i32, i32
  }
}

</mosaic_0001>

<llo_original>
// kernel: tpu_custom_call.1
$region0: #{tpu_custom_call.1}
  #allocation0 [shape = 'u32[]', space=smem, size = 0x4, offset = 0x4, fixed_abs, tag = 'smem constant byte address 0x4 - core index']
  #allocation1 [shape = 'u32[72,128]{1,0:T(1,128)}', space=vmem, size = 0x9000, scoped, tag = 'internal scratch']
  %s0 = inlined_call_operand.vmem [shape: f32[8,32], index: 0, kind: input, shape index: {}]
  %s1 = inlined_call_operand.vmem [shape: f32[32,128], index: 1, kind: input, shape index: {}]
  %s2 = inlined_call_operand.vmem [shape: f32[1,128], index: 2, kind: input, shape index: {}]
  %s3 = inlined_call_operand.vmem [shape: f32[128,32], index: 3, kind: input, shape index: {}]
  %s4 = inlined_call_operand.vmem [shape: f32[1,32], index: 4, kind: input, shape index: {}]
  %s5 = inlined_call_operand.hbm [shape: f32[8,32], index: 5, kind: output, shape index: {}]
  %s6 = sld [smem:[#allocation0]]
  $region30: #{tpu_custom_call.1} parent=0
    _
  %s8 = ssub.s32 1, %s6
  %s9 = scalar_select 0, %s8, %s6
  $region1: #{tpu_custom_call.1} parent=0
    #allocation2 [shape = 'u8[4096]{0}', space=vmem, size = 0x1000, scoped, tag = 'output window, operand 0, single buffered']
    #allocation3 [shape = 's32[1]{0}', space=sflag, size = 0x4, scoped, tag = 'scoped memory for tpu_custom_call.1']
    %10 = vsyncpa [#allocation3], 0
    // Predicated region
    $region2: #{tpu_custom_call.1} parent=1 // pred_check
      _
    $region3: #{tpu_custom_call.1} parent=1 // pred_check_branch
      %12 = sbr.rel (0) target = $region5
    $region4: #{tpu_custom_call.1} parent=1 // pred_region
      _
    $region5: #{tpu_custom_call.1} parent=1 // pred_fallthru
      _
    // Predicated region
    $region6: #{tpu_custom_call.1} parent=1 // pred_check
      _
    $region7: #{tpu_custom_call.1} parent=1 // pred_check_branch
      %14 = sbr.rel (0) target = $region9
    $region8: #{tpu_custom_call.1} parent=1 // pred_region
      _
    $region9: #{tpu_custom_call.1} parent=1 // pred_fallthru
      _
    // Predicated region
    $region10: #{tpu_custom_call.1} parent=1 // pred_check
      _
    $region11: #{tpu_custom_call.1} parent=1 // pred_check_branch
      %16 = sbr.rel (0) target = $region13
    $region12: #{tpu_custom_call.1} parent=1 // pred_region
      _
    $region13: #{tpu_custom_call.1} parent=1 // pred_fallthru
      _
    // Predicated region
    $region14: #{tpu_custom_call.1} parent=1 // pred_check
      _
    $region15: #{tpu_custom_call.1} parent=1 // pred_check_branch
      %18 = sbr.rel (0) target = $region17
    $region16: #{tpu_custom_call.1} parent=1 // pred_region
      _
    $region17: #{tpu_custom_call.1} parent=1 // pred_fallthru
      _
    // Predicated region
    $region18: #{tpu_custom_call.1} parent=1 // pred_check
      _
    $region19: #{tpu_custom_call.1} parent=1 // pred_check_branch
      %20 = sbr.rel (0) target = $region21
    $region20: #{tpu_custom_call.1} parent=1 // pred_region
      _
    $region21: #{tpu_custom_call.1} parent=1 // pred_fallthru
      _
    %v21 = vld [vmem:[%s0] sm:$0xff]
    %v22 = vld [vmem:[%s1] sm:$0xff]
    %v23 = vld [vmem:[%s1 + $0x8] sm:$0xff]
    %v24 = vld [vmem:[%s1 + $0x10] sm:$0xff]
    %v25 = vld [vmem:[%s1 + $0x18] sm:$0xff]
    %v26 = vld [vmem:[%s2] sm:$0x1]
    %v28 = vperm.slane %v26, 0
    %vm30 = vcmask 261120
    %v32 = vsel %vm30, %v21, 0
    %34 = vmatpush.msra.mxu0 0.0
    %35 = vmatpush.msra.mxu0 0.0
    %36 = vmatpush.msra.mxu0 0.0
    %37 = vmatpush.msra.mxu0 0.0
    %38 = vmatpush.msra.mxu0 0.0
    %39 = vmatpush.msra.mxu0 0.0
    %40 = vmatpush.msra.mxu0 0.0
    %41 = vmatpush.msra.mxu0 0.0
    %42 = vmatpush.msra.mxu0 0.0
    %43 = vmatpush.msra.mxu0 0.0
    %44 = vmatpush.msra.mxu0 0.0
    %45 = vmatpush.msra.mxu0 0.0
    %46 = vmatpush.msra.mxu0 %v25
    %47 = vmatpush.msra.mxu0 %v24
    %48 = vmatpush.msra.mxu0 %v23
    %49 = vmatpush.msra.mxu0 %v22
    %50 = vmatmul.f32.gmra.mxu0 %v32
    %v51 = vpop.f32.mrf.mxu0
    %v52 = vadd.f32 %v28, %v51
    %53 = vdwg.mxu0
    %v54 = vmul.f32 %v52, 0.5
    %v55 = vmul.f32 %v52, 0.70710677
    %v56 = vmul.f32 %v55, %v55
    %v57 = vmin.f32 16.0, %v56
    %v58 = vmul.f32 %v57, 2.1237322e-06
    %v59 = vadd.f32 %v58, 0.00028619796
    %v60 = vmul.f32 %v57, %v59
    %v61 = vadd.f32 %v60, 0.0036580483
    %v62 = vmul.f32 %v57, %v61
    %v63 = vadd.f32 %v62, 0.05243302
    %v64 = vmul.f32 %v57, %v63
    %v65 = vadd.f32 %v64, 0.18741608
    %v66 = vmul.f32 %v57, %v65
    %v67 = vadd.f32 %v66, 1.1283791
    %v68 = vmul.f32 %v55, %v67
    %v69 = vmul.f32 %v57, 3.8918573e-05
    %v70 = vadd.f32 %v69, 0.001143296
    %v71 = vmul.f32 %v57, %v70
    %v72 = vadd.f32 %v71, 0.014752088
    %v73 = vmul.f32 %v57, %v72
    %v74 = vadd.f32 %v73, 0.112945676
    %v75 = vmul.f32 %v57, %v74
    %v76 = vadd.f32 %v75, 0.4994258
    %v77 = vmul.f32 %v57, %v76
    %v78 = vadd.f32 %v77, 1.0
    %v79 = vrcp.pop %v78
    %v80 = vmul.f32 %v78, %v79
    %v81 = vsub.f32 1.0, %v80
    %v82 = vmul.f32 %v79, %v81
    %v83 = vadd.f32 %v79, %v82
    %vm84 = vweird.f32 %v78
    %vm85 = vweird.f32 %v79
    %vm86 = vmor %vm84, %vm85
    %v87 = vsel %vm86, %v79, %v83
    %v88 = vand.u32 2147483647, %v78
    %vm89 = vcmp.eq.f32.partialorder %v88, 8.507059e+37
    %v90 = vand.u32 %v78, 2147483648
    %v91 = vor.u32 1.1754944e-38, %v90
    %v92 = vsel %vm89, %v91, %v87
    %v93 = vmul.f32 %v68, %v92
    %v94 = vmin.f32 %v93, 1.0
    %v95 = vmax.f32 %v94, -1.0
    %v96 = vadd.f32 %v95, 1.0
    %v97 = vmul.f32 %v54, %v96
    %v98 = vld [vmem:[%s3] sm:$0xff]
    %v99 = vld [vmem:[%s3 + $0x8] sm:$0xff]
    %v100 = vld [vmem:[%s3 + $0x10] sm:$0xff]
    %v101 = vld [vmem:[%s3 + $0x18] sm:$0xff]
    %v102 = vld [vmem:[%s3 + $0x20] sm:$0xff]
    %v103 = vld [vmem:[%s3 + $0x28] sm:$0xff]
    %v104 = vld [vmem:[%s3 + $0x30] sm:$0xff]
    %v105 = vld [vmem:[%s3 + $0x38] sm:$0xff]
    %v106 = vld [vmem:[%s3 + $0x40] sm:$0xff]
    %v107 = vld [vmem:[%s3 + $0x48] sm:$0xff]
    %v108 = vld [vmem:[%s3 + $0x50] sm:$0xff]
    %v109 = vld [vmem:[%s3 + $0x58] sm:$0xff]
    %v110 = vld [vmem:[%s3 + $0x60] sm:$0xff]
    %v111 = vld [vmem:[%s3 + $0x68] sm:$0xff]
    %v112 = vld [vmem:[%s3 + $0x70] sm:$0xff]
    %v113 = vld [vmem:[%s3 + $0x78] sm:$0xff]
    %v114 = vld [vmem:[%s4] sm:$0x1]
    %v116 = vperm.slane %v114, 0
    %118 = vmatpush.msra.mxu0 %v113
    %119 = vmatpush.msra.mxu0 %v112
    %120 = vmatpush.msra.mxu0 %v111
    %121 = vmatpush.msra.mxu0 %v110
    %122 = vmatpush.msra.mxu0 %v109
    %123 = vmatpush.msra.mxu0 %v108
    %124 = vmatpush.msra.mxu0 %v107
    %125 = vmatpush.msra.mxu0 %v106
    %126 = vmatpush.msra.mxu0 %v105
    %127 = vmatpush.msra.mxu0 %v104
    %128 = vmatpush.msra.mxu0 %v103
    %129 = vmatpush.msra.mxu0 %v102
    %130 = vmatpush.msra.mxu0 %v101
    %131 = vmatpush.msra.mxu0 %v100
    %132 = vmatpush.msra.mxu0 %v99
    %133 = vmatpush.msra.mxu0 %v98
    %134 = vmatmul.f32.gmra.mxu0 %v97
    %v135 = vpop.f32.mrf.mxu0
    %v136 = vadd.f32 %v116, %v135
    %137 = vdwg.mxu0
    %138 = vst.msk [vmem:[#allocation2] sm:$0xff] %vm30, %v136
    // Predicated region
    $region22: #{tpu_custom_call.1} parent=1 // pred_check
      _
    $region23: #{tpu_custom_call.1} parent=1 // pred_check_branch
      %140 = sbr.rel (0) target = $region25
    $region24: #{tpu_custom_call.1} parent=1 // pred_region
      %142 = vsyncadd [#allocation3], 0
      %s144 = sshll.u32 [#allocation2], 4
      %s145 = int_to_ptr.vmem [resolvable:$true] %s144
      %s146 = sshll.u32 %s5, 4
      %s147 = int_to_ptr.hbm [resolvable:$true] %s146
      %149 = dma.vmem_to_hbm [thread:$0]  %s145, 128, %s147, [#allocation3]
    $region25: #{tpu_custom_call.1} parent=1 // pred_fallthru
      _
    // Predicated region
    $region26: #{tpu_custom_call.1} parent=1 // pred_check
      _
    $region27: #{tpu_custom_call.1} parent=1 // pred_check_branch
      %151 = sbr.rel (0) target = $region29
    $region28: #{tpu_custom_call.1} parent=1 // pred_region
      %153 = dma.done [#allocation3], 128
    $region29: #{tpu_custom_call.1} parent=1 // pred_fallthru
      _
    %154 = vsyncpa [#allocation3], 1

</llo_original>
